<compile_context>
chip_gen: v5e
topology: v5e:2x2
jax: 0.10.0
libtpu: 0.0.40
codegen_flags: <defaults>
</compile_context>

<pallas_src>
import functools

import jax
import jax.numpy as jnp
from jax.experimental import pallas as pl
from jax.experimental.pallas import tpu as pltpu


def _round_up(x: int, m: int) -> int:
    return ((x + m - 1) // m) * m


@functools.lru_cache(maxsize=1)
def _vmem_cap_bytes() -> int:
    """~0.75x physical VMEM; 48 MiB fallback is safe on every generation."""
    try:
        phys = int(pltpu.get_tpu_info().vmem_capacity_bytes)
        return max(32 << 20, (phys * 3) // 4)
    except Exception:
        return 48 << 20


_K_RESIDENT_MAX = 2048        # K up to this stays a single full-extent block
_SMALL_PROBLEM_MACS = 1 << 18  # below this, pallas_call fixed cost dominates


# ---------------------------------------------------------------- kernels ----
def _laplace_kernel_single_k(x_ref, w_ref, o_ref):
    # K fits one block: MXU result goes straight to the output tile.
    o_ref[...] = jnp.dot(
        x_ref[...], w_ref[...], preferred_element_type=jnp.float32
    ).astype(o_ref.dtype)


def _laplace_kernel_acc_inplace(x_ref, w_ref, o_ref):
    # K tiled, f32 output: accumulate directly in the resident output block.
    @pl.when(pl.program_id(2) == 0)
    def _():
        o_ref[...] = jnp.zeros_like(o_ref)

    o_ref[...] += jnp.dot(
        x_ref[...], w_ref[...], preferred_element_type=jnp.float32
    )


def _laplace_kernel_acc_scratch(x_ref, w_ref, o_ref, acc_ref):
    # K tiled, non-f32 output: f32 scratch accumulator, cast once at the end.
    @pl.when(pl.program_id(2) == 0)
    def _():
        acc_ref[...] = jnp.zeros_like(acc_ref)

    acc_ref[...] += jnp.dot(
        x_ref[...], w_ref[...], preferred_element_type=jnp.float32
    )

    @pl.when(pl.program_id(2) == pl.num_programs(2) - 1)
    def _():
        o_ref[...] = acc_ref[...].astype(o_ref.dtype)


# ---------------------------------------------------------------- wrapper ----
@functools.partial(
    jax.jit,
    static_argnames=("tm", "tn", "tk", "compute_dtype", "force_pallas"),
)
def laplace_forward(x, weight, *, tm=None, tn=None, tk=None,
                    compute_dtype=None, force_pallas=False):
    """LaplaceLayer.forward: x @ weight.T.

    x: (..., input_dim), weight: (output_dim, input_dim) -> (..., output_dim).
    """
    *lead, K = x.shape
    N, K_w = weight.shape
    assert K == K_w, (K, K_w)
    M = 1
    for d in lead:
        M *= d

    out_dtype = x.dtype

    # Small-problem bypass: a fused XLA dot beats pallas_call fixed overhead.
    if not force_pallas and M * N * K <= _SMALL_PROBLEM_MACS:
        return jnp.matmul(x, weight.T)

    in_dt = (jnp.dtype(compute_dtype) if compute_dtype is not None
             else jnp.dtype(x.dtype))
    sub = 16 if in_dt == jnp.dtype(jnp.bfloat16) else 8  # sublane granularity

    cap = _vmem_cap_bytes()
    max_tile = 1024 if cap >= (64 << 20) else 512  # bigger tiles on 128MiB gens

    # ---- N: pad only the (tiny) weight so output stores are lane-dense. ----
    Np = _round_up(N, 128)
    if tn is None:
        if Np <= max_tile:
            tn = Np
        elif Np % 512 == 0:
            tn = 512
        elif Np % 256 == 0:
            tn = 256
        else:
            tn = 128
    assert tn % 128 == 0 and Np % tn == 0, (tn, Np)

    # ---- M: never padded; Pallas masks the ragged edge tile. ----
    if tm is None:
        if M < sub:
            tm = M                              # full-extent block (always legal)
        else:
            tm = min(max_tile, (M // sub) * sub)
            # v7x megacore: give both TensorCores work when N has one block.
            if (Np // tn) == 1 and pl.cdiv(M, tm) < 2:
                half = _round_up(pl.cdiv(M, 2), sub)
                if half < tm:
                    tm = half
    assert tm == M or tm % sub == 0, f"tm={tm} must be a multiple of {sub}"

    # ---- operands (weight transposed ONCE in the wrapper, outside the kernel)
    x2d = x.reshape(M, K)
    if x2d.dtype != in_dt:
        # NOTE: standalone cast of x is an extra HBM pass; only happens when
        # the caller explicitly asks for a different compute_dtype.
        x2d = x2d.astype(in_dt)
    w_t = weight.T.astype(in_dt)                # (K, N)
    if Np != N:
        w_t = jnp.pad(w_t, ((0, 0), (0, Np - N)))

    in_bytes = in_dt.itemsize
    out_bytes = jnp.dtype(out_dtype).itemsize

    k_resident = (K <= _K_RESIDENT_MAX) if tk is None else (tk >= K)

    if k_resident:
        # Weight-resident fast path: no K grid axis, no accumulator, no K pad.
        # N tiles outer so the (K, tn) weight block is DMA'd once per j and
        # stays in VMEM while x streams over the inner M axis.
        grid = (Np // tn, pl.cdiv(M, tm))
        kernel = _laplace_kernel_single_k
        in_specs = [
            pl.BlockSpec((tm, K), lambda j, i: (i, 0)),
            pl.BlockSpec((K, tn), lambda j, i: (0, j)),
        ]
        out_specs = pl.BlockSpec((tm, tn), lambda j, i: (i, j))
        scratch = []
        dims = ("parallel", "parallel")
        working = 2 * (tm * K + K * tn) * in_bytes + 2 * tm * tn * out_bytes
    else:
        # Large-K path: K innermost "arbitrary" axis.  Reduction axis must be
        # exact, so zero-pad K (exact for a matmul); rare for Laplace shapes.
        tk = 512 if tk is None else tk
        assert tk % 128 == 0, f"tk={tk} must be a multiple of 128"
        Kp = _round_up(K, tk)
        if Kp != K:
            x2d = jnp.pad(x2d, ((0, 0), (0, Kp - K)))
            w_t = jnp.pad(w_t, ((0, Kp - K), (0, 0)))
        kt = Kp // tk
        grid = (pl.cdiv(M, tm), Np // tn, kt)
        in_specs = [
            pl.BlockSpec((tm, tk), lambda i, j, k: (i, k)),
            pl.BlockSpec((tk, tn), lambda i, j, k: (k, j)),
        ]
        out_specs = pl.BlockSpec((tm, tn), lambda i, j, k: (i, j))
        if jnp.dtype(out_dtype) == jnp.dtype(jnp.float32):
            kernel = _laplace_kernel_acc_inplace    # accumulate in o_ref
            scratch = []
            acc_bytes = 0
        else:
            kernel = _laplace_kernel_acc_scratch
            scratch = [pltpu.VMEM((tm, tn), jnp.float32)]
            acc_bytes = tm * tn * 4
        dims = ("parallel", "parallel", "arbitrary")
        working = (2 * (tm * tk + tk * tn) * in_bytes
                   + 2 * tm * tn * out_bytes + acc_bytes)

    vmem_limit = min(cap, max(32 << 20, (working * 3) // 2))

    cost = pl.CostEstimate(
        flops=2 * M * Np * K,
        transcendentals=0,
        bytes_accessed=in_bytes * (M * K + K * Np) + out_bytes * M * Np,
    )

    out2d = pl.pallas_call(
        kernel,
        out_shape=jax.ShapeDtypeStruct((M, Np), out_dtype),
        grid_spec=pltpu.PrefetchScalarGridSpec(
            num_scalar_prefetch=0,
            grid=grid,
            in_specs=in_specs,
            out_specs=out_specs,
            scratch_shapes=scratch,
        ),
        compiler_params=pltpu.CompilerParams(
            dimension_semantics=dims,
            vmem_limit_bytes=vmem_limit,
        ),
        cost_estimate=cost,
    )(x2d, w_t)

    if Np != N:
        out2d = out2d[:, :N]     # only the N axis is ever padded / sliced
    return out2d.reshape(*lead, N)


if __name__ == "__main__":
    # LaplaceLayer(input_dim=32, output_dim=64); x: (batch=2, seq=8, input_dim=32)
    input_dim, output_dim = 32, 64
    key = jax.random.PRNGKey(0)
    kx, kw = jax.random.split(key)

    x = jax.random.normal(kx, (2, 8, input_dim), dtype=jnp.float32)
    # Deterministic init mirroring torch.randn(output_dim, input_dim)
    weight = jax.random.normal(kw, (output_dim, input_dim), dtype=jnp.float32)

    ref = x @ weight.T

    # Pallas kernel path (forced: the default wrapper bypasses tiny problems).
    out = jax.block_until_ready(laplace_forward(x, weight, force_pallas=True))
    assert out.shape == (2, 8, output_dim)
    # Tolerance loose enough for MXU bf16-pass vs XLA f32 dot differences.
    assert jnp.allclose(out, ref, atol=1e-2, rtol=1e-2), "mismatch vs reference"

    # Default path for this tiny shape: small-problem bypass (fused XLA dot).
    out_small = jax.block_until_ready(laplace_forward(x, weight))
    assert jnp.allclose(out_small, ref, atol=1e-2, rtol=1e-2), "bypass mismatch"

    print("KERNEL_OK")
</pallas_src>

<mosaic_0001>
module attributes {stable_mosaic.version = 11 : i64} {
  func.func @_laplace_kernel_single_k(%arg0: i32, %arg1: i32, %arg2: memref<8x32xf32, #tpu.memory_space<vmem>>, %arg3: memref<32x128xf32, #tpu.memory_space<vmem>>, %arg4: memref<8x128xf32, #tpu.memory_space<vmem>>) attributes {dimension_semantics = [#tpu.dimension_semantics<parallel>, #tpu.dimension_semantics<parallel>], iteration_bounds = array<i64: 1, 2>, scalar_prefetch = 0 : i64, scratch_operands = 0 : i64, tpu.core_type = #tpu.core_type<tc>, window_params = [{transform_indices = @transform_0, window_bounds = array<i64: 8, 32>}, {transform_indices = @transform_1, window_bounds = array<i64: 32, 128>}, {transform_indices = @transform_2, window_bounds = array<i64: 8, 128>}]} {
    %c0 = arith.constant 0 : index
    %c0_0 = arith.constant 0 : index
    %0 = vector.load %arg2[%c0, %c0_0] : memref<8x32xf32, #tpu.memory_space<vmem>>, vector<8x32xf32>
    %c0_1 = arith.constant 0 : index
    %c0_2 = arith.constant 0 : index
    %1 = vector.load %arg3[%c0_1, %c0_2] : memref<32x128xf32, #tpu.memory_space<vmem>>, vector<32x128xf32>
    %cst = arith.constant dense<0.000000e+00> : vector<8x128xf32>
    %2 = tpu.matmul %0, %1, %cst {dimension_numbers = #tpu.dot_dimension_numbers<[1], [0], [0], [1], [0, 0, 1, 1], [], []>} : vector<8x32xf32>, vector<32x128xf32>, vector<8x128xf32> -> vector<8x128xf32>
    %c0_3 = arith.constant 0 : index
    %c0_4 = arith.constant 0 : index
    %3 = vector.load %arg4[%c0_3, %c0_4] : memref<8x128xf32, #tpu.memory_space<vmem>>, vector<8x128xf32>
    tpu.vector_store %arg4[%c0_3, %c0_4], %2 {strides = array<i32>} : memref<8x128xf32, #tpu.memory_space<vmem>>, vector<8x128xf32>,
    return
  }
  func.func @transform_0(%arg0: i32, %arg1: i32) -> (i32, i32) {
    %c0_i32 = arith.constant 0 : i32
    %c0_i32_0 = arith.constant 0 : i32
    return %arg1, %c0_i32 : i32, i32
  }
  func.func @transform_1(%arg0: i32, %arg1: i32) -> (i32, i32) {
    %c0_i32 = arith.constant 0 : i32
    %c0_i32_0 = arith.constant 0 : i32
    return %c0_i32, %arg0 : i32, i32
  }
  func.func @transform_2(%arg0: i32, %arg1: i32) -> (i32, i32) {
    %c0_i32 = arith.constant 0 : i32
    return %arg1, %arg0 : i32, i32
  }
}

</mosaic_0001>

<llo_original>
// kernel: laplace_forward.1
$region0: #{laplace_forward.1}
  #allocation0 [shape = 'u32[]', space=smem, size = 0x4, offset = 0x4, fixed_abs, tag = 'smem constant byte address 0x4 - core index']
  #allocation1 [shape = 'u32[72,128]{1,0:T(1,128)}', space=vmem, size = 0x9000, scoped, tag = 'internal scratch']
  %s0 = inlined_call_operand.vmem [shape: f32[16,32], index: 0, kind: input, shape index: {}]
  %s1 = inlined_call_operand.vmem [shape: f32[32,128], index: 1, kind: input, shape index: {}]
  %s2 = inlined_call_operand.vmem [shape: f32[16,128], index: 2, kind: output, shape index: {}]
  %s3 = sld [smem:[#allocation0]]
  $region41: #{laplace_forward.1} parent=0
    _
  %s5 = ssub.s32 1, %s3
  %s6 = scalar_select 0, %s5, %s3
  loop: start=0, step=1, limit=4
  $region2: #{laplace_forward.1} parent=0 // loop_pre_header
    _
  $region3: #{laplace_forward.1} parent=0 // loop_header
    %s8 = sphi 0, %s12
    %p9 = scmp.ge.s32.totalorder %s8, 4
    %s15 = sphi 0, %s27
    %s16 = sphi 0, %s23
    %s17 = sphi 0, %s15
    %s18 = sphi 0, %s16
    %s19 = sphi 0, %s17
    %s20 = sphi 0, %s18
    %s30 = sphi 0, %s32
    %s33 = sphi 0, %s30
    %s34 = sphi 0, %s33
    %s50 = sphi 0, %s34
    %s56 = sphi 0, %s58
    %s59 = sphi 0, %s56
    %s60 = sphi 0, %s59
    %s76 = sphi 0, %s60
    %s84 = sphi 0, %s86
    %s87 = sphi 0, %s84
    %s88 = sphi 0, %s87
    %s104 = sphi 0, %s88
  $region4: #{laplace_forward.1} parent=0 // loop_header_branch
    %11 = sbr.rel (%p9) target = $region8
  $region5: #{laplace_forward.1} parent=0 // loop_body
    %s13 = ssub.s32 %s8, 1
    %s14 = ssub.s32 %s8, 2
    %s21 = sadd.s32 1, %s16
    %p22 = scmp.ge.s32.totalorder %s21, 2
    %s23 = scalar_select %p22, 0, %s21
    %s24 = sadd.s32 1, %s15
    %s25 = scalar_select %p22, %s24, %s15
    %p26 = scmp.ge.s32.totalorder %s25, 1
    %s27 = scalar_select %p26, 0, %s25
    %s28 = ssub.s32 %s16, %s23
    %p29 = scmp.eq.s32.totalorder %s28, 0
    %s31 = sadd.s32 %s30, 1
    %s32 = scalar_select %p29, %s30, %s31
    %p35 = pneg %p29
    %p36 = scmp.eq.s32.totalorder %s8, 1
    %p37 = por %p35, %p36
    %p38 = scmp.ne.s32.totalorder %s30, %s33
    %p39 = scmp.eq.s32.totalorder %s8, 0
    %p40 = por %p38, %p39
    %p41 = scmp.ne.s32.totalorder %s30, %s33
    %p42 = scmp.eq.s32.totalorder %s13, 1
    %p43 = por %p41, %p42
    %p44 = scmp.ne.s32.totalorder %s33, %s34
    %p45 = scmp.eq.s32.totalorder %s13, 0
    %p46 = por %p44, %p45
    %p47 = scmp.ne.s32.totalorder %s33, %s34
    %p48 = scmp.eq.s32.totalorder %s14, 1
    %p49 = por %p47, %p48
    %p51 = scmp.ne.s32.totalorder %s34, %s50
    %p52 = scmp.eq.s32.totalorder %s14, 0
    %p53 = por %p51, %p52
    %s54 = ssub.s32 %s15, %s27
    %p55 = scmp.eq.s32.totalorder %s54, 0
    %s57 = sadd.s32 %s56, 1
    %s58 = scalar_select %p55, %s56, %s57
    %p61 = pneg %p55
    %p62 = scmp.eq.s32.totalorder %s8, 1
    %p63 = por %p61, %p62
    %p64 = scmp.ne.s32.totalorder %s56, %s59
    %p65 = scmp.eq.s32.totalorder %s8, 0
    %p66 = por %p64, %p65
    %p67 = scmp.ne.s32.totalorder %s56, %s59
    %p68 = scmp.eq.s32.totalorder %s13, 1
    %p69 = por %p67, %p68
    %p70 = scmp.ne.s32.totalorder %s59, %s60
    %p71 = scmp.eq.s32.totalorder %s13, 0
    %p72 = por %p70, %p71
    %p73 = scmp.ne.s32.totalorder %s59, %s60
    %p74 = scmp.eq.s32.totalorder %s14, 1
    %p75 = por %p73, %p74
    %p77 = scmp.ne.s32.totalorder %s60, %s76
    %p78 = scmp.eq.s32.totalorder %s14, 0
    %p79 = por %p77, %p78
    %s80 = ssub.s32 %s16, %s23
    %s81 = ssub.s32 %s15, %s27
    %s82 = sor.u32 %s80, %s81
    %p83 = scmp.eq.s32.totalorder %s82, 0
    %s85 = sadd.s32 %s84, 1
    %s86 = scalar_select %p83, %s84, %s85
    %p89 = pneg %p83
    %p90 = scmp.eq.s32.totalorder %s8, 1
    %p91 = por %p89, %p90
    %p92 = scmp.ne.s32.totalorder %s84, %s87
    %p93 = scmp.eq.s32.totalorder %s8, 0
    %p94 = por %p92, %p93
    %p95 = scmp.ne.s32.totalorder %s84, %s87
    %p96 = scmp.eq.s32.totalorder %s13, 1
    %p97 = por %p95, %p96
    %p98 = scmp.ne.s32.totalorder %s87, %s88
    %p99 = scmp.eq.s32.totalorder %s13, 0
    %p100 = por %p98, %p99
    %p101 = scmp.ne.s32.totalorder %s87, %s88
    %p102 = scmp.eq.s32.totalorder %s14, 1
    %p103 = por %p101, %p102
    %p105 = scmp.ne.s32.totalorder %s88, %s104
    %p106 = scmp.eq.s32.totalorder %s14, 0
    %p107 = por %p105, %p106
    %p108 = scmp.le.s32.totalorder 1, %s8
    %p109 = scmp.lt.s32.totalorder %s8, 3
    %p110 = pnand %p108, %p109
    %p111 = pneg %p110
    // Predicated region
    $region9: #{laplace_forward.1} parent=5 // pred_check
      _
    $region10: #{laplace_forward.1} parent=5 // pred_check_branch
      %113 = sbr.rel (%p110) target = $region12
    $region11: #{laplace_forward.1} parent=5 // pred_region
      %s114 = ssub.s32 %s8, 1
      // Predicated region
      $region13: #{laplace_forward.1} parent=11 // pred_check
        %p115 = pneg %p72
      $region14: #{laplace_forward.1} parent=11 // pred_check_branch
        %117 = sbr.rel (%p115) target = $region16
      $region15: #{laplace_forward.1} parent=11 // pred_region
        %p118 = scmp.lt.s32.totalorder %s17, 0
        %s119 = scalar_select %p118, %s17, 0
        %s120 = smul.addr %s119, 8
        %s121 = scalar_lea.vmem %s1, %s120
      $region16: #{laplace_forward.1} parent=11 // pred_fallthru
        _
    $region12: #{laplace_forward.1} parent=5 // pred_fallthru
      _
    %p122 = scmp.lt.s32.totalorder %s8, 2
    // Predicated region
    $region17: #{laplace_forward.1} parent=5 // pred_check
      %p123 = pneg %p122
    $region18: #{laplace_forward.1} parent=5 // pred_check_branch
      %125 = sbr.rel (%p123) target = $region20
    $region19: #{laplace_forward.1} parent=5 // pred_region
      // Predicated region
      $region21: #{laplace_forward.1} parent=19 // pred_check
        %p126 = pneg %p40
      $region22: #{laplace_forward.1} parent=19 // pred_check_branch
        %128 = sbr.rel (%p126) target = $region24
      $region23: #{laplace_forward.1} parent=19 // pred_region
        %p129 = scmp.lt.s32.totalorder %s16, 1
        %s130 = scalar_select %p129, %s16, 1
        %s131 = smul.addr %s130, 8
        %s132 = scalar_lea.vmem %s0, %s131
      $region24: #{laplace_forward.1} parent=19 // pred_fallthru
        _
    $region20: #{laplace_forward.1} parent=5 // pred_fallthru
      _
    %p133 = scmp.le.s32.totalorder 1, %s8
    %p134 = scmp.lt.s32.totalorder %s8, 3
    %p135 = pnand %p133, %p134
    %p136 = pneg %p135
    // Predicated region
    $region25: #{laplace_forward.1} parent=5 // pred_check
      _
    $region26: #{laplace_forward.1} parent=5 // pred_check_branch
      %138 = sbr.rel (%p135) target = $region28
    $region27: #{laplace_forward.1} parent=5 // pred_region
      %s139 = ssub.s32 %s8, 1
      %p140 = scmp.lt.s32.totalorder %s18, 1
      %s141 = scalar_select %p140, %s18, 1
      %s142 = smul.addr %s141, 8
      %s143 = scalar_lea.vmem %s0, %s142
      %p144 = pneg %p46
      %p145 = pneg %p43
      %p146 = scmp.lt.s32.totalorder %s17, 0
      %s147 = scalar_select %p146, %s17, 0
      %s148 = smul.addr %s147, 8
      %s149 = scalar_lea.vmem %s1, %s148
      %p150 = pneg %p72
      %p151 = pneg %p69
      %p152 = pneg %p100
      %p153 = pneg %p97
      %p154 = scmp.lt.s32.totalorder %s18, 1
      %s155 = scalar_select %p154, %s18, 1
      %p156 = scmp.lt.s32.totalorder %s17, 0
      %s157 = scalar_select %p156, %s17, 0
      %s158 = sadd.s32 %s157, %s155
      %s159 = smul.addr %s158, 8
      %s160 = scalar_lea.vmem %s2, %s159
      %p161 = scmp.lt.s32.totalorder %s18, 1
      %s162 = scalar_select %p161, %s18, 1
      %s163 = smul.addr %s162, 8
      %s164 = scalar_lea.vmem %s0, %s163
      %p165 = scmp.lt.s32.totalorder %s17, 0
      %s166 = scalar_select %p165, %s17, 0
      %s167 = smul.addr %s166, 8
      %s168 = scalar_lea.vmem %s1, %s167
      %p169 = scmp.lt.s32.totalorder %s18, 1
      %s170 = scalar_select %p169, %s18, 1
      %p171 = scmp.lt.s32.totalorder %s17, 0
      %s172 = scalar_select %p171, %s17, 0
      %s173 = sadd.s32 %s172, %s170
      %s174 = smul.addr %s173, 8
      %s175 = scalar_lea.vmem %s2, %s174
      %v176 = vld [vmem:[%s164] sm:$0xff]
      %v177 = vld [vmem:[%s168] sm:$0xff]
      %v178 = vld [vmem:[%s168 + $0x8] sm:$0xff]
      %v179 = vld [vmem:[%s168 + $0x10] sm:$0xff]
      %v180 = vld [vmem:[%s168 + $0x18] sm:$0xff]
      %vm181 = vcmask 261120
      %v183 = vsel %vm181, %v176, 0
      %185 = vmatpush.msra.mxu0 0.0
      %186 = vmatpush.msra.mxu0 0.0
      %187 = vmatpush.msra.mxu0 0.0
      %188 = vmatpush.msra.mxu0 0.0
      %189 = vmatpush.msra.mxu0 0.0
      %190 = vmatpush.msra.mxu0 0.0
      %191 = vmatpush.msra.mxu0 0.0
      %192 = vmatpush.msra.mxu0 0.0
      %193 = vmatpush.msra.mxu0 0.0
      %194 = vmatpush.msra.mxu0 0.0
      %195 = vmatpush.msra.mxu0 0.0
      %196 = vmatpush.msra.mxu0 0.0
      %197 = vmatpush.msra.mxu0 %v180
      %198 = vmatpush.msra.mxu0 %v179
      %199 = vmatpush.msra.mxu0 %v178
      %200 = vmatpush.msra.mxu0 %v177
      %201 = vmatmul.f32.gmra.mxu0 %v183
      %v202 = vpop.f32.mrf.mxu0
      %v203 = vadd.f32 0.0, %v202
      %204 = vdwg.mxu0
      %205 = vst [vmem:[%s175] sm:$0xff] %v203
      %p206 = scmp.lt.s32.totalorder %s18, 1
      %s207 = scalar_select %p206, %s18, 1
      %p208 = scmp.lt.s32.totalorder %s17, 0
      %s209 = scalar_select %p208, %s17, 0
      %s210 = sadd.s32 %s209, %s207
      %s211 = smul.addr %s210, 8
      %s212 = scalar_lea.vmem %s2, %s211
      // Predicated region
      $region29: #{laplace_forward.1} parent=27 // pred_check
        %p213 = pneg %p97
      $region30: #{laplace_forward.1} parent=27 // pred_check_branch
        %215 = sbr.rel (%p213) target = $region32
      $region31: #{laplace_forward.1} parent=27 // pred_region
        _
      $region32: #{laplace_forward.1} parent=27 // pred_fallthru
        _
    $region28: #{laplace_forward.1} parent=5 // pred_fallthru
      _
    %p216 = scmp.le.s32.totalorder 2, %s8
    // Predicated region
    $region33: #{laplace_forward.1} parent=5 // pred_check
      %p217 = pneg %p216
    $region34: #{laplace_forward.1} parent=5 // pred_check_branch
      %219 = sbr.rel (%p217) target = $region36
    $region35: #{laplace_forward.1} parent=5 // pred_region
      %s220 = ssub.s32 %s8, 2
      // Predicated region
      $region37: #{laplace_forward.1} parent=35 // pred_check
        %p221 = pneg %p103
      $region38: #{laplace_forward.1} parent=35 // pred_check_branch
        %223 = sbr.rel (%p221) target = $region40
      $region39: #{laplace_forward.1} parent=35 // pred_region
        %p224 = scmp.lt.s32.totalorder %s20, 1
        %s225 = scalar_select %p224, %s20, 1
        %p226 = scmp.lt.s32.totalorder %s19, 0
        %s227 = scalar_select %p226, %s19, 0
        %s228 = sadd.s32 %s227, %s225
        %s229 = smul.addr %s228, 8
        %s230 = scalar_lea.vmem %s2, %s229
      $region40: #{laplace_forward.1} parent=35 // pred_fallthru
        _
    $region36: #{laplace_forward.1} parent=5 // pred_fallthru
      _
  $region6: #{laplace_forward.1} parent=0 // loop_footer
    %s12 = sadd.s32 1, %s8
  $region7: #{laplace_forward.1} parent=0 // loop_footer_branch
    %7 = sbr.rel target = $region3
  $region8: #{laplace_forward.1} parent=0 // loop_exit
    _

</llo_original>
